<compile_context>
chip_gen: v5e
topology: v5e:2x2
jax: 0.10.0
libtpu: 0.0.40
codegen_flags: <defaults>
</compile_context>

<pallas_src>
import math
from functools import partial

import jax
import jax.numpy as jnp
from jax import lax
from jax.experimental import pallas as pl
from jax.experimental.pallas import tpu as pltpu


# ------------------------------- fused kernels ------------------------------


def _fourier_attn_kernel_pos(q_in_ref, k_in_ref, v_in_ref, pos_ref,
                             w_qkv_ref, b_qkv_ref, pos_fc_ref, wfc_v_ref,
                             bfc_ref, out_ref, attn_ref, *,
                             n_head, d_k, seq_len, batch_tile, scale):
    """One batch tile (batch_tile elements) per grid step; all refs in VMEM.

    q_in/k_in/v_in : (bt*S, d_model)       flattened rows of the batch tile
    pos            : (bt*S, pos_pad)       pre-scaled by sqrt(scale), zero-padded
    w_qkv          : (3, d_model, d_model), b_qkv: (3, 1, d_model)
    pos_fc         : (bt, n_head*S, d_model)   rows h*S:(h+1)*S = pos_b @ Wfc_pos_h
    wfc_v          : (n_head*d_k, d_model)     rows h*d_k:(h+1)*d_k = Wfc_v_h
    bfc            : (1, d_model)
    out            : (bt*S, d_model),  attn: (bt*S, n_head*S)   lane-dense slab
    """
    S = seq_len
    d_model = n_head * d_k

    # Fat Q/K/V projections over the whole batch tile (M = bt*S rows per matmul).
    q = jnp.dot(q_in_ref[...], w_qkv_ref[0],
                preferred_element_type=jnp.float32) + b_qkv_ref[0]
    k = jnp.dot(k_in_ref[...], w_qkv_ref[1],
                preferred_element_type=jnp.float32) + b_qkv_ref[1]
    v = jnp.dot(v_in_ref[...], w_qkv_ref[2],
                preferred_element_type=jnp.float32) + b_qkv_ref[2]
    # Fold the 1/(sqrt(d_k+pos_dim) * seq_len) scale into Q (O(rows*d_model)
    # instead of O(H*S^2)); the pos term carries it via the sqrt(scale) prescale.
    q = q * scale
    pos = pos_ref[...]

    for b in range(batch_tile):              # static unroll, static row slices
        r0, r1 = b * S, (b + 1) * S
        qb, kb, vb, pb = q[r0:r1], k[r0:r1], v[r0:r1], pos[r0:r1]

        # Shared pos@pos^T score term (already scaled; padded cols are zero).
        ps = lax.dot_general(pb, pb, (((1,), (1,)), ((), ())),
                             preferred_element_type=jnp.float32)      # (S, S)

        p_heads, ov_heads = [], []
        for h in range(n_head):
            cs = slice(h * d_k, (h + 1) * d_k)
            s_h = lax.dot_general(qb[:, cs], kb[:, cs], (((1,), (1,)), ((), ())),
                                  preferred_element_type=jnp.float32)
            p_h = s_h + ps                   # 'fourier': scores/seq_len, no softmax
            p_heads.append(p_h)
            ov_heads.append(jnp.dot(p_h, vb[:, cs],
                                    preferred_element_type=jnp.float32))

        # Lane-dense slabs: one wide attn store + two wide fc matmuls.
        p_slab = jnp.concatenate(p_heads, axis=-1)        # (S, n_head*S)
        ov_slab = jnp.concatenate(ov_heads, axis=-1)      # (S, d_model)
        attn_ref[r0:r1, :] = p_slab.astype(attn_ref.dtype)

        acc = jnp.dot(p_slab, pos_fc_ref[b], preferred_element_type=jnp.float32)
        acc = acc + jnp.dot(ov_slab, wfc_v_ref[...],
                            preferred_element_type=jnp.float32)
        out_ref[r0:r1, :] = (acc + bfc_ref[...]).astype(out_ref.dtype)


def _fourier_attn_kernel_nopos(q_in_ref, k_in_ref, v_in_ref, w_qkv_ref, b_qkv_ref,
                               out_ref, attn_ref, *,
                               n_head, d_k, seq_len, batch_tile, scale):
    """No-pos specialization: reference skips the fc, output is the head concat."""
    S = seq_len
    q = jnp.dot(q_in_ref[...], w_qkv_ref[0],
                preferred_element_type=jnp.float32) + b_qkv_ref[0]
    k = jnp.dot(k_in_ref[...], w_qkv_ref[1],
                preferred_element_type=jnp.float32) + b_qkv_ref[1]
    v = jnp.dot(v_in_ref[...], w_qkv_ref[2],
                preferred_element_type=jnp.float32) + b_qkv_ref[2]
    q = q * scale

    for b in range(batch_tile):
        r0, r1 = b * S, (b + 1) * S
        qb, kb, vb = q[r0:r1], k[r0:r1], v[r0:r1]
        p_heads, ov_heads = [], []
        for h in range(n_head):
            cs = slice(h * d_k, (h + 1) * d_k)
            p_h = lax.dot_general(qb[:, cs], kb[:, cs], (((1,), (1,)), ((), ())),
                                  preferred_element_type=jnp.float32)
            p_heads.append(p_h)
            ov_heads.append(jnp.dot(p_h, vb[:, cs],
                                    preferred_element_type=jnp.float32))
        attn_ref[r0:r1, :] = jnp.concatenate(p_heads, axis=-1).astype(attn_ref.dtype)
        out_ref[r0:r1, :] = jnp.concatenate(ov_heads, axis=-1).astype(out_ref.dtype)


# -------------------------- parameter initialization ------------------------


def init_params(rng, d_model, n_head, pos_dim, xavier_init=1e-4, diagonal_weight=1e-2):
    """Deterministic re-implementation of SimpleAttention._reset_parameters."""
    keys = jax.random.split(rng, 5)
    bound = xavier_init * math.sqrt(6.0 / (d_model + d_model))
    params = {}
    for name, kk in zip(("q", "k", "v"), keys[:3]):
        w = jax.random.uniform(
            kk, (d_model, d_model), jnp.float32, minval=-bound, maxval=bound)
        w = w + diagonal_weight * jnp.eye(d_model, dtype=jnp.float32)
        params[f"w{name}"] = w                      # stored as (Din, Dout)
        params[f"b{name}"] = jnp.zeros((d_model,), jnp.float32)
    fc_in = d_model + n_head * pos_dim
    fb = 1.0 / math.sqrt(fc_in)
    params["wfc"] = jax.random.uniform(
        keys[3], (fc_in, d_model), jnp.float32, minval=-fb, maxval=fb)
    params["bfc"] = jax.random.uniform(
        keys[4], (d_model,), jnp.float32, minval=-fb, maxval=fb)
    return params


# ------------------------------ forward pass ---------------------------------


def _pick_batch_tile(batch, seq_len):
    """Rows per grid step: try to fill the MXU M dim (>=256 rows) while keeping
    at least 2 grid steps when batch allows (v7x megacore), and keep the block's
    sublane dim (bt*S) a multiple of 8."""
    target_rows = 256
    bt = max(1, min(batch, target_rows // max(seq_len, 1)))
    while batch % bt:
        bt -= 1
    if batch // bt < 2 <= batch:
        bt = max(1, batch // 2)
        while batch % bt:
            bt -= 1
    if (bt * seq_len) % 8 != 0:
        bt = batch                       # fall back to a full-extent block
    return max(bt, 1)


def simple_attention_forward(params, query, key, value, pos=None, *, n_head, pos_dim):
    """SimpleAttention forward (attention_type='fourier', norm=False, eval mode)."""
    B, S, d_model = query.shape
    assert d_model % n_head == 0
    d_k = d_model // n_head
    H = n_head

    bt = _pick_batch_tile(B, S)
    n_steps = B // bt

    w_qkv = jnp.stack([params["wq"], params["wk"], params["wv"]])          # (3,dm,dm)
    b_qkv = jnp.stack([params["bq"], params["bk"], params["bv"]]).reshape(3, 1, d_model)

    q2 = query.reshape(B * S, d_model)
    k2 = key.reshape(B * S, d_model)
    v2 = value.reshape(B * S, d_model)

    row_spec = pl.BlockSpec((bt * S, d_model), lambda i: (i, 0))
    const3 = lambda i: (0, 0, 0)
    const2 = lambda i: (0, 0)

    has_pos = (pos is not None) and pos_dim > 0
    if has_pos:
        assert pos.shape == (B, S, pos_dim)
        D = d_k + pos_dim
        scale = 1.0 / (math.sqrt(D) * S)

        # fc weight rows are ordered per head as [pos_dim rows | d_k rows].
        wfc_heads = params["wfc"].reshape(H, D, d_model)
        wfc_pos = wfc_heads[:, :pos_dim, :]                                # (H,P,dm)
        wfc_v = wfc_heads[:, pos_dim:, :].reshape(H * d_k, d_model)        # stacked rows
        # pos @ Wfc_pos_h, stacked over heads along rows: (B, H*S, d_model).
        # O(S) per batch (the O(S^2) pos-score matrix is computed in-kernel now).
        pos_fc = jnp.einsum("bsp,hpd->bhsd", pos, wfc_pos,
                            precision=lax.Precision.HIGHEST).reshape(B, H * S, d_model)
        bfc2 = params["bfc"].reshape(1, d_model)

        # Kernel-side pos: pre-scaled by sqrt(scale) so pos@pos^T already carries
        # the 1/(sqrt(D)*S) factor; zero-padded to >=8 feature columns so the
        # in-kernel contraction is not a degenerate K=1 matmul.
        pos_pad = max(pos_dim, 8)
        pos_k = pos * jnp.float32(math.sqrt(scale))
        if pos_pad > pos_dim:
            pos_k = jnp.pad(pos_k, ((0, 0), (0, 0), (0, pos_pad - pos_dim)))
        pos_k = pos_k.reshape(B * S, pos_pad)

        kern = partial(_fourier_attn_kernel_pos, n_head=H, d_k=d_k, seq_len=S,
                       batch_tile=bt, scale=scale)
        in_specs = [
            row_spec, row_spec, row_spec,                                   # q, k, v
            pl.BlockSpec((bt * S, pos_pad), lambda i: (i, 0)),              # pos
            pl.BlockSpec((3, d_model, d_model), const3),                    # w_qkv
            pl.BlockSpec((3, 1, d_model), const3),                          # b_qkv
            pl.BlockSpec((bt, H * S, d_model), lambda i: (i, 0, 0)),        # pos_fc
            pl.BlockSpec((d_model, d_model), const2),                       # wfc_v
            pl.BlockSpec((1, d_model), const2),                             # bfc
        ]
        args = (q2, k2, v2, pos_k, w_qkv, b_qkv, pos_fc, wfc_v, bfc2)
        pos_pad_cols = pos_pad
    else:
        scale = 1.0 / (math.sqrt(d_k) * S)
        kern = partial(_fourier_attn_kernel_nopos, n_head=H, d_k=d_k, seq_len=S,
                       batch_tile=bt, scale=scale)
        in_specs = [row_spec, row_spec, row_spec,
                    pl.BlockSpec((3, d_model, d_model), const3),
                    pl.BlockSpec((3, 1, d_model), const3)]
        args = (q2, k2, v2, w_qkv, b_qkv)
        pos_pad_cols = 0

    out_specs = (row_spec,                                                  # att_output rows
                 pl.BlockSpec((bt * S, H * S), lambda i: (i, 0)))           # attn slab

    # Rough per-step VMEM estimate (double-buffered blocks + intermediates),
    # clamped to v7x's 64 MiB physical budget.
    fp = 4
    est = fp * (2 * (bt * S * (3 * d_model + pos_pad_cols)
                     + bt * H * S * d_model
                     + 4 * d_model * d_model + 4 * d_model
                     + bt * S * (d_model + H * S))
                + 6 * bt * S * max(d_model, H * S))
    vmem_limit = int(min(max(est, 32 * 1024 * 1024), 64 * 1024 * 1024))

    out2, attn2 = pl.pallas_call(
        kern,
        out_shape=(jax.ShapeDtypeStruct((B * S, d_model), jnp.float32),
                   jax.ShapeDtypeStruct((B * S, H * S), jnp.float32)),
        grid=(n_steps,),
        in_specs=in_specs,
        out_specs=out_specs,
        compiler_params=pltpu.CompilerParams(
            dimension_semantics=("parallel",),
            vmem_limit_bytes=vmem_limit),
    )(*args)

    att_output = out2.reshape(B, S, d_model)
    attn_weight = attn2.reshape(B, S, H, S).transpose(0, 2, 1, 3)
    return att_output, attn_weight


# --------------------------- pure-JAX reference ------------------------------


def _reference_forward(params, query, key, value, pos, *, n_head, pos_dim):
    """Direct transliteration of the PyTorch module (fourier, norm=False, eval)."""
    B, S, d_model = query.shape
    d_k = d_model // n_head
    hp = lax.Precision.HIGHEST

    def proj(x, w, b):
        return jnp.einsum("bsd,de->bse", x, w, precision=hp) + b

    def split(x):
        return x.reshape(B, S, n_head, d_k).transpose(0, 2, 1, 3)

    q = split(proj(query, params["wq"], params["bq"]))
    k = split(proj(key, params["wk"], params["bk"]))
    v = split(proj(value, params["wv"], params["bv"]))

    if pos is not None and pos_dim > 0:
        p = jnp.broadcast_to(pos[:, None], (B, n_head, S, pos_dim))
        q = jnp.concatenate([p, q], axis=-1)
        k = jnp.concatenate([p, k], axis=-1)
        v = jnp.concatenate([p, v], axis=-1)

    D = q.shape[-1]
    scores = jnp.einsum("bhsd,bhtd->bhst", q, k, precision=hp) / math.sqrt(D)
    p_attn = scores / S
    x = jnp.einsum("bhst,bhtd->bhsd", p_attn, v, precision=hp)
    x = x.transpose(0, 2, 1, 3).reshape(B, S, n_head * D)
    if pos is not None and pos_dim > 0:
        x = jnp.einsum("bsf,fd->bsd", x, params["wfc"], precision=hp) + params["bfc"]
    return x, p_attn


# ---------------------------------- main -------------------------------------

if __name__ == "__main__":
    B, S, d_model, n_head, pos_dim = 2, 16, 32, 4, 1

    root = jax.random.PRNGKey(0)
    k_param, k_q, k_k, k_v, k_p = jax.random.split(root, 5)

    params = init_params(k_param, d_model, n_head, pos_dim)

    query = jax.random.normal(k_q, (B, S, d_model), jnp.float32)
    key = jax.random.normal(k_k, (B, S, d_model), jnp.float32)
    value = jax.random.normal(k_v, (B, S, d_model), jnp.float32)
    pos = jax.random.normal(k_p, (B, S, pos_dim), jnp.float32)

    fwd = jax.jit(partial(simple_attention_forward, n_head=n_head, pos_dim=pos_dim))
    att_out, attn_w = fwd(params, query, key, value, pos)
    jax.block_until_ready((att_out, attn_w))

    assert att_out.shape == (B, S, d_model)
    assert attn_w.shape == (B, n_head, S, S)
    assert bool(jnp.all(jnp.isfinite(att_out))) and bool(jnp.all(jnp.isfinite(attn_w)))

    # Sanity check vs a pure-JAX reference (loose tolerance: TPU may route f32
    # matmuls through bf16 passes at default precision).
    ref_out, ref_attn = _reference_forward(params, query, key, value, pos,
                                           n_head=n_head, pos_dim=pos_dim)
    assert bool(jnp.allclose(att_out, ref_out, rtol=2e-2, atol=5e-4)), (
        "att_output mismatch, max abs err = %e"
        % float(jnp.max(jnp.abs(att_out - ref_out))))
    assert bool(jnp.allclose(attn_w, ref_attn, rtol=2e-2, atol=5e-4)), (
        "attn_weight mismatch, max abs err = %e"
        % float(jnp.max(jnp.abs(attn_w - ref_attn))))

    print("KERNEL_OK")
</pallas_src>

<mosaic_0001>
module attributes {stable_mosaic.version = 11 : i64} {
  func.func @_fourier_attn_kernel_pos(%arg0: i32, %arg1: memref<16x32xf32, #tpu.memory_space<vmem>>, %arg2: memref<16x32xf32, #tpu.memory_space<vmem>>, %arg3: memref<16x32xf32, #tpu.memory_space<vmem>>, %arg4: memref<16x8xf32, #tpu.memory_space<vmem>>, %arg5: memref<3x32x32xf32, #tpu.memory_space<vmem>>, %arg6: memref<3x1x32xf32, #tpu.memory_space<vmem>>, %arg7: memref<1x64x32xf32, #tpu.memory_space<vmem>>, %arg8: memref<32x32xf32, #tpu.memory_space<vmem>>, %arg9: memref<1x32xf32, #tpu.memory_space<vmem>>, %arg10: memref<16x32xf32, #tpu.memory_space<vmem>>, %arg11: memref<16x64xf32, #tpu.memory_space<vmem>>) attributes {dimension_semantics = [#tpu.dimension_semantics<parallel>], iteration_bounds = array<i64: 2>, scalar_prefetch = 0 : i64, scratch_operands = 0 : i64, tpu.core_type = #tpu.core_type<tc>, window_params = [{transform_indices = @transform_0, window_bounds = array<i64: 16, 32>}, {transform_indices = @transform_1, window_bounds = array<i64: 16, 32>}, {transform_indices = @transform_2, window_bounds = array<i64: 16, 32>}, {transform_indices = @transform_3, window_bounds = array<i64: 16, 8>}, {pipeline_mode = #tpu.pipeline_mode<synchronous>, transform_indices = @transform_4, window_bounds = array<i64: 3, 32, 32>}, {pipeline_mode = #tpu.pipeline_mode<synchronous>, transform_indices = @transform_5, window_bounds = array<i64: 3, 1, 32>}, {transform_indices = @transform_6, window_bounds = array<i64: 1, 64, 32>}, {pipeline_mode = #tpu.pipeline_mode<synchronous>, transform_indices = @transform_7, window_bounds = array<i64: 32, 32>}, {pipeline_mode = #tpu.pipeline_mode<synchronous>, transform_indices = @transform_8, window_bounds = array<i64: 1, 32>}, {transform_indices = @transform_9, window_bounds = array<i64: 16, 32>}, {transform_indices = @transform_10, window_bounds = array<i64: 16, 64>}]} {
    %c0 = arith.constant 0 : index
    %c0_0 = arith.constant 0 : index
    %0 = vector.load %arg1[%c0, %c0_0] : memref<16x32xf32, #tpu.memory_space<vmem>>, vector<16x32xf32>
    %c0_1 = arith.constant 0 : index
    %c0_2 = arith.constant 0 : index
    %c0_3 = arith.constant 0 : index
    %1 = vector.load %arg5[%c0_1, %c0_2, %c0_3] : memref<3x32x32xf32, #tpu.memory_space<vmem>>, vector<1x32x32xf32>
    %2 = vector.shape_cast %1 : vector<1x32x32xf32> to vector<32x32xf32>
    %cst = arith.constant dense<0.000000e+00> : vector<16x32xf32>
    %3 = tpu.matmul %0, %2, %cst {dimension_numbers = #tpu.dot_dimension_numbers<[1], [0], [0], [1], [0, 0, 1, 1], [], []>} : vector<16x32xf32>, vector<32x32xf32>, vector<16x32xf32> -> vector<16x32xf32>
    %c0_4 = arith.constant 0 : index
    %c0_5 = arith.constant 0 : index
    %c0_6 = arith.constant 0 : index
    %4 = vector.load %arg6[%c0_4, %c0_5, %c0_6] : memref<3x1x32xf32, #tpu.memory_space<vmem>>, vector<1x1x32xf32>
    %5 = vector.shape_cast %4 : vector<1x1x32xf32> to vector<1x32xf32>
    %6 = vector.broadcast %5 : vector<1x32xf32> to vector<16x32xf32>
    %7 = arith.addf %3, %6 : vector<16x32xf32>
    %c0_7 = arith.constant 0 : index
    %c0_8 = arith.constant 0 : index
    %8 = vector.load %arg2[%c0_7, %c0_8] : memref<16x32xf32, #tpu.memory_space<vmem>>, vector<16x32xf32>
    %c1 = arith.constant 1 : index
    %c0_9 = arith.constant 0 : index
    %c0_10 = arith.constant 0 : index
    %9 = vector.load %arg5[%c1, %c0_9, %c0_10] : memref<3x32x32xf32, #tpu.memory_space<vmem>>, vector<1x32x32xf32>
    %10 = vector.shape_cast %9 : vector<1x32x32xf32> to vector<32x32xf32>
    %cst_11 = arith.constant dense<0.000000e+00> : vector<16x32xf32>
    %11 = tpu.matmul %8, %10, %cst_11 {dimension_numbers = #tpu.dot_dimension_numbers<[1], [0], [0], [1], [0, 0, 1, 1], [], []>} : vector<16x32xf32>, vector<32x32xf32>, vector<16x32xf32> -> vector<16x32xf32>
    %c1_12 = arith.constant 1 : index
    %c0_13 = arith.constant 0 : index
    %c0_14 = arith.constant 0 : index
    %12 = vector.load %arg6[%c1_12, %c0_13, %c0_14] : memref<3x1x32xf32, #tpu.memory_space<vmem>>, vector<1x1x32xf32>
    %13 = vector.shape_cast %12 : vector<1x1x32xf32> to vector<1x32xf32>
    %14 = vector.broadcast %13 : vector<1x32xf32> to vector<16x32xf32>
    %15 = arith.addf %11, %14 : vector<16x32xf32>
    %c0_15 = arith.constant 0 : index
    %c0_16 = arith.constant 0 : index
    %16 = vector.load %arg3[%c0_15, %c0_16] : memref<16x32xf32, #tpu.memory_space<vmem>>, vector<16x32xf32>
    %c2 = arith.constant 2 : index
    %c0_17 = arith.constant 0 : index
    %c0_18 = arith.constant 0 : index
    %17 = vector.load %arg5[%c2, %c0_17, %c0_18] : memref<3x32x32xf32, #tpu.memory_space<vmem>>, vector<1x32x32xf32>
    %18 = vector.shape_cast %17 : vector<1x32x32xf32> to vector<32x32xf32>
    %cst_19 = arith.constant dense<0.000000e+00> : vector<16x32xf32>
    %19 = tpu.matmul %16, %18, %cst_19 {dimension_numbers = #tpu.dot_dimension_numbers<[1], [0], [0], [1], [0, 0, 1, 1], [], []>} : vector<16x32xf32>, vector<32x32xf32>, vector<16x32xf32> -> vector<16x32xf32>
    %c2_20 = arith.constant 2 : index
    %c0_21 = arith.constant 0 : index
    %c0_22 = arith.constant 0 : index
    %20 = vector.load %arg6[%c2_20, %c0_21, %c0_22] : memref<3x1x32xf32, #tpu.memory_space<vmem>>, vector<1x1x32xf32>
    %21 = vector.shape_cast %20 : vector<1x1x32xf32> to vector<1x32xf32>
    %22 = vector.broadcast %21 : vector<1x32xf32> to vector<16x32xf32>
    %23 = arith.addf %19, %22 : vector<16x32xf32>
    %cst_23 = arith.constant 0.020833334 : f32
    %24 = vector.broadcast %cst_23 : f32 to vector<16x32xf32>
    %25 = arith.mulf %7, %24 : vector<16x32xf32>
    %c0_24 = arith.constant 0 : index
    %c0_25 = arith.constant 0 : index
    %26 = vector.load %arg4[%c0_24, %c0_25] : memref<16x8xf32, #tpu.memory_space<vmem>>, vector<16x8xf32>
    %cst_26 = arith.constant dense<0.000000e+00> : vector<16x16xf32>
    %27 = tpu.matmul %26, %26, %cst_26 {dimension_numbers = #tpu.dot_dimension_numbers<[1], [1], [0], [0], [0, 0, 1, 0], [], []>} : vector<16x8xf32>, vector<16x8xf32>, vector<16x16xf32> -> vector<16x16xf32>
    %28 = vector.extract_strided_slice %25 {offsets = [0, 0], sizes = [16, 8], strides = [1, 1]} : vector<16x32xf32> to vector<16x8xf32>
    %29 = vector.extract_strided_slice %15 {offsets = [0, 0], sizes = [16, 8], strides = [1, 1]} : vector<16x32xf32> to vector<16x8xf32>
    %cst_27 = arith.constant dense<0.000000e+00> : vector<16x16xf32>
    %30 = tpu.matmul %28, %29, %cst_27 {dimension_numbers = #tpu.dot_dimension_numbers<[1], [1], [0], [0], [0, 0, 1, 0], [], []>} : vector<16x8xf32>, vector<16x8xf32>, vector<16x16xf32> -> vector<16x16xf32>
    %31 = arith.addf %30, %27 : vector<16x16xf32>
    %32 = vector.extract_strided_slice %23 {offsets = [0, 0], sizes = [16, 8], strides = [1, 1]} : vector<16x32xf32> to vector<16x8xf32>
    %cst_28 = arith.constant dense<0.000000e+00> : vector<16x8xf32>
    %33 = tpu.matmul %31, %32, %cst_28 {dimension_numbers = #tpu.dot_dimension_numbers<[1], [0], [0], [1], [0, 0, 1, 1], [], []>} : vector<16x16xf32>, vector<16x8xf32>, vector<16x8xf32> -> vector<16x8xf32>
    %34 = vector.extract_strided_slice %25 {offsets = [0, 8], sizes = [16, 8], strides = [1, 1]} : vector<16x32xf32> to vector<16x8xf32>
    %35 = vector.extract_strided_slice %15 {offsets = [0, 8], sizes = [16, 8], strides = [1, 1]} : vector<16x32xf32> to vector<16x8xf32>
    %cst_29 = arith.constant dense<0.000000e+00> : vector<16x16xf32>
    %36 = tpu.matmul %34, %35, %cst_29 {dimension_numbers = #tpu.dot_dimension_numbers<[1], [1], [0], [0], [0, 0, 1, 0], [], []>} : vector<16x8xf32>, vector<16x8xf32>, vector<16x16xf32> -> vector<16x16xf32>
    %37 = arith.addf %36, %27 : vector<16x16xf32>
    %38 = vector.extract_strided_slice %23 {offsets = [0, 8], sizes = [16, 8], strides = [1, 1]} : vector<16x32xf32> to vector<16x8xf32>
    %cst_30 = arith.constant dense<0.000000e+00> : vector<16x8xf32>
    %39 = tpu.matmul %37, %38, %cst_30 {dimension_numbers = #tpu.dot_dimension_numbers<[1], [0], [0], [1], [0, 0, 1, 1], [], []>} : vector<16x16xf32>, vector<16x8xf32>, vector<16x8xf32> -> vector<16x8xf32>
    %40 = vector.extract_strided_slice %25 {offsets = [0, 16], sizes = [16, 8], strides = [1, 1]} : vector<16x32xf32> to vector<16x8xf32>
    %41 = vector.extract_strided_slice %15 {offsets = [0, 16], sizes = [16, 8], strides = [1, 1]} : vector<16x32xf32> to vector<16x8xf32>
    %cst_31 = arith.constant dense<0.000000e+00> : vector<16x16xf32>
    %42 = tpu.matmul %40, %41, %cst_31 {dimension_numbers = #tpu.dot_dimension_numbers<[1], [1], [0], [0], [0, 0, 1, 0], [], []>} : vector<16x8xf32>, vector<16x8xf32>, vector<16x16xf32> -> vector<16x16xf32>
    %43 = arith.addf %42, %27 : vector<16x16xf32>
    %44 = vector.extract_strided_slice %23 {offsets = [0, 16], sizes = [16, 8], strides = [1, 1]} : vector<16x32xf32> to vector<16x8xf32>
    %cst_32 = arith.constant dense<0.000000e+00> : vector<16x8xf32>
    %45 = tpu.matmul %43, %44, %cst_32 {dimension_numbers = #tpu.dot_dimension_numbers<[1], [0], [0], [1], [0, 0, 1, 1], [], []>} : vector<16x16xf32>, vector<16x8xf32>, vector<16x8xf32> -> vector<16x8xf32>
    %46 = vector.extract_strided_slice %25 {offsets = [0, 24], sizes = [16, 8], strides = [1, 1]} : vector<16x32xf32> to vector<16x8xf32>
    %47 = vector.extract_strided_slice %15 {offsets = [0, 24], sizes = [16, 8], strides = [1, 1]} : vector<16x32xf32> to vector<16x8xf32>
    %cst_33 = arith.constant dense<0.000000e+00> : vector<16x16xf32>
    %48 = tpu.matmul %46, %47, %cst_33 {dimension_numbers = #tpu.dot_dimension_numbers<[1], [1], [0], [0], [0, 0, 1, 0], [], []>} : vector<16x8xf32>, vector<16x8xf32>, vector<16x16xf32> -> vector<16x16xf32>
    %49 = arith.addf %48, %27 : vector<16x16xf32>
    %50 = vector.extract_strided_slice %23 {offsets = [0, 24], sizes = [16, 8], strides = [1, 1]} : vector<16x32xf32> to vector<16x8xf32>
    %cst_34 = arith.constant dense<0.000000e+00> : vector<16x8xf32>
    %51 = tpu.matmul %49, %50, %cst_34 {dimension_numbers = #tpu.dot_dimension_numbers<[1], [0], [0], [1], [0, 0, 1, 1], [], []>} : vector<16x16xf32>, vector<16x8xf32>, vector<16x8xf32> -> vector<16x8xf32>
    %52 = tpu.concatenate %31, %37, %43, %49 in 1 : vector<16x16xf32>, vector<16x16xf32>, vector<16x16xf32>, vector<16x16xf32> -> vector<16x64xf32>
    %53 = tpu.concatenate %33, %39, %45, %51 in 1 : vector<16x8xf32>, vector<16x8xf32>, vector<16x8xf32>, vector<16x8xf32> -> vector<16x32xf32>
    %c0_35 = arith.constant 0 : index
    %c0_36 = arith.constant 0 : index
    %54 = vector.load %arg11[%c0_35, %c0_36] : memref<16x64xf32, #tpu.memory_space<vmem>>, vector<16x64xf32>
    tpu.vector_store %arg11[%c0_35, %c0_36], %52 {strides = array<i32>} : memref<16x64xf32, #tpu.memory_space<vmem>>, vector<16x64xf32>,
    %c0_37 = arith.constant 0 : index
    %c0_38 = arith.constant 0 : index
    %c0_39 = arith.constant 0 : index
    %55 = vector.load %arg7[%c0_37, %c0_38, %c0_39] : memref<1x64x32xf32, #tpu.memory_space<vmem>>, vector<1x64x32xf32>
    %56 = vector.shape_cast %55 : vector<1x64x32xf32> to vector<64x32xf32>
    %cst_40 = arith.constant dense<0.000000e+00> : vector<16x32xf32>
    %57 = tpu.matmul %52, %56, %cst_40 {dimension_numbers = #tpu.dot_dimension_numbers<[1], [0], [0], [1], [0, 0, 1, 1], [], []>} : vector<16x64xf32>, vector<64x32xf32>, vector<16x32xf32> -> vector<16x32xf32>
    %c0_41 = arith.constant 0 : index
    %c0_42 = arith.constant 0 : index
    %58 = vector.load %arg8[%c0_41, %c0_42] : memref<32x32xf32, #tpu.memory_space<vmem>>, vector<32x32xf32>
    %cst_43 = arith.constant dense<0.000000e+00> : vector<16x32xf32>
    %59 = tpu.matmul %53, %58, %cst_43 {dimension_numbers = #tpu.dot_dimension_numbers<[1], [0], [0], [1], [0, 0, 1, 1], [], []>} : vector<16x32xf32>, vector<32x32xf32>, vector<16x32xf32> -> vector<16x32xf32>
    %60 = arith.addf %57, %59 : vector<16x32xf32>
    %c0_44 = arith.constant 0 : index
    %c0_45 = arith.constant 0 : index
    %61 = vector.load %arg9[%c0_44, %c0_45] : memref<1x32xf32, #tpu.memory_space<vmem>>, vector<1x32xf32>
    %62 = vector.broadcast %61 : vector<1x32xf32> to vector<16x32xf32>
    %63 = arith.addf %60, %62 : vector<16x32xf32>
    %c0_46 = arith.constant 0 : index
    %c0_47 = arith.constant 0 : index
    %64 = vector.load %arg10[%c0_46, %c0_47] : memref<16x32xf32, #tpu.memory_space<vmem>>, vector<16x32xf32>
    tpu.vector_store %arg10[%c0_46, %c0_47], %63 {strides = array<i32>} : memref<16x32xf32, #tpu.memory_space<vmem>>, vector<16x32xf32>,
    return
  }
  func.func @transform_0(%arg0: i32) -> (i32, i32) {
    %c0_i32 = arith.constant 0 : i32
    %c0_i32_0 = arith.constant 0 : i32
    return %arg0, %c0_i32 : i32, i32
  }
  func.func @transform_1(%arg0: i32) -> (i32, i32) {
    %c0_i32 = arith.constant 0 : i32
    %c0_i32_0 = arith.constant 0 : i32
    return %arg0, %c0_i32 : i32, i32
  }
  func.func @transform_2(%arg0: i32) -> (i32, i32) {
    %c0_i32 = arith.constant 0 : i32
    %c0_i32_0 = arith.constant 0 : i32
    return %arg0, %c0_i32 : i32, i32
  }
  func.func @transform_3(%arg0: i32) -> (i32, i32) {
    %c0_i32 = arith.constant 0 : i32
    %c0_i32_0 = arith.constant 0 : i32
    return %arg0, %c0_i32 : i32, i32
  }
  func.func @transform_4(%arg0: i32) -> (i32, i32, i32) {
    %c0_i32 = arith.constant 0 : i32
    %c0_i32_0 = arith.constant 0 : i32
    %c0_i32_1 = arith.constant 0 : i32
    %c0_i32_2 = arith.constant 0 : i32
    return %c0_i32, %c0_i32_0, %c0_i32_1 : i32, i32, i32
  }
  func.func @transform_5(%arg0: i32) -> (i32, i32, i32) {
    %c0_i32 = arith.constant 0 : i32
    %c0_i32_0 = arith.constant 0 : i32
    %c0_i32_1 = arith.constant 0 : i32
    %c0_i32_2 = arith.constant 0 : i32
    return %c0_i32, %c0_i32_0, %c0_i32_1 : i32, i32, i32
  }
  func.func @transform_6(%arg0: i32) -> (i32, i32, i32) {
    %c0_i32 = arith.constant 0 : i32
    %c0_i32_0 = arith.constant 0 : i32
    %c0_i32_1 = arith.constant 0 : i32
    return %arg0, %c0_i32, %c0_i32_0 : i32, i32, i32
  }
  func.func @transform_7(%arg0: i32) -> (i32, i32) {
    %c0_i32 = arith.constant 0 : i32
    %c0_i32_0 = arith.constant 0 : i32
    %c0_i32_1 = arith.constant 0 : i32
    return %c0_i32, %c0_i32_0 : i32, i32
  }
  func.func @transform_8(%arg0: i32) -> (i32, i32) {
    %c0_i32 = arith.constant 0 : i32
    %c0_i32_0 = arith.constant 0 : i32
    %c0_i32_1 = arith.constant 0 : i32
    return %c0_i32, %c0_i32_0 : i32, i32
  }
  func.func @transform_9(%arg0: i32) -> (i32, i32) {
    %c0_i32 = arith.constant 0 : i32
    %c0_i32_0 = arith.constant 0 : i32
    return %arg0, %c0_i32 : i32, i32
  }
  func.func @transform_10(%arg0: i32) -> (i32, i32) {
    %c0_i32 = arith.constant 0 : i32
    %c0_i32_0 = arith.constant 0 : i32
    return %arg0, %c0_i32 : i32, i32
  }
}

</mosaic_0001>

<llo_original>
// kernel: simple_attention_forward.1
$region0: #{simple_attention_forward.1}
  #allocation0 [shape = 'u32[]', space=smem, size = 0x4, offset = 0x4, fixed_abs, tag = 'smem constant byte address 0x4 - core index']
  #allocation1 [shape = 'u32[72,128]{1,0:T(1,128)}', space=vmem, size = 0x9000, scoped, tag = 'internal scratch']
  %s0 = inlined_call_operand.vmem [shape: f32[32,32], index: 0, kind: input, shape index: {}]
  %s1 = inlined_call_operand.vmem [shape: f32[32,32], index: 1, kind: input, shape index: {}]
  %s2 = inlined_call_operand.vmem [shape: f32[32,32], index: 2, kind: input, shape index: {}]
  %s3 = inlined_call_operand.vmem [shape: f32[32,8], index: 3, kind: input, shape index: {}]
  %s4 = inlined_call_operand.vmem [shape: f32[3,32,32], index: 4, kind: input, shape index: {}]
  %s5 = inlined_call_operand.vmem [shape: f32[3,1,32], index: 5, kind: input, shape index: {}]
  %s6 = inlined_call_operand.vmem [shape: f32[2,64,32], index: 6, kind: input, shape index: {}]
  %s7 = inlined_call_operand.vmem [shape: f32[32,32], index: 7, kind: input, shape index: {}]
  %s8 = inlined_call_operand.vmem [shape: f32[1,32], index: 8, kind: input, shape index: {}]
  %s9 = inlined_call_operand.hbm [shape: f32[32,32], index: 9, kind: output, shape index: {0}]
  %s10 = inlined_call_operand.vmem [shape: f32[32,64], index: 10, kind: output, shape index: {1}]
  %11 = xla_tuple %s9, %s10
  %s12 = sld [smem:[#allocation0]]
  $region77: #{simple_attention_forward.1} parent=0
    _
  %s14 = ssub.s32 1, %s12
  %s15 = scalar_select 0, %s14, %s12
  $region1: #{simple_attention_forward.1} parent=0
    #allocation2 [shape = 'u8[16384]{0}', space=vmem, size = 0x4000, scoped, tag = 'output window, operand 0']
    #allocation3 [shape = 's32[2]{0}', space=sflag, size = 0x8, scoped, tag = 'scoped memory for simple_attention_forward.1']
    %16 = vsyncpa [#allocation3], 0
    %s17 = scalar_lea.sflag [#allocation3], 1
    %18 = vsyncpa %s17, 0
    loop: start=0, step=1, limit=4
    $region2: #{simple_attention_forward.1} parent=1 // loop_pre_header
      _
    $region3: #{simple_attention_forward.1} parent=1 // loop_header
      %s20 = sphi 0, %s24
      %p21 = scmp.ge.s32.totalorder %s20, 4
      %s30 = sphi 0, %s32
      %s33 = sphi 0, %s30
      %s34 = sphi 0, %s33
      %s50 = sphi 0, %s34
      %s56 = sphi 0, %s58
      %s59 = sphi 0, %s56
      %s60 = sphi 0, %s59
      %s76 = sphi 0, %s60
      %s82 = sphi 0, %s84
      %s85 = sphi 0, %s82
      %s86 = sphi 0, %s85
      %s102 = sphi 0, %s86
      %s108 = sphi 0, %s110
      %s111 = sphi 0, %s108
      %s112 = sphi 0, %s111
      %s128 = sphi 0, %s112
      %s132 = sphi 0, %s132
      %s134 = sphi 0, %s132
      %s135 = sphi 0, %s134
      %s149 = sphi 0, %s135
      %s153 = sphi 0, %s153
      %s155 = sphi 0, %s153
      %s156 = sphi 0, %s155
      %s170 = sphi 0, %s156
      %s176 = sphi 0, %s178
      %s179 = sphi 0, %s176
      %s180 = sphi 0, %s179
      %s196 = sphi 0, %s180
      %s200 = sphi 0, %s200
      %s202 = sphi 0, %s200
      %s203 = sphi 0, %s202
      %s217 = sphi 0, %s203
      %s221 = sphi 0, %s221
      %s223 = sphi 0, %s221
      %s224 = sphi 0, %s223
      %s238 = sphi 0, %s224
      %s244 = sphi 0, %s246
      %s247 = sphi 0, %s244
      %s248 = sphi 0, %s247
      %s264 = sphi 0, %s248
      %s270 = sphi 0, %s272
      %s273 = sphi 0, %s270
      %s274 = sphi 0, %s273
      %s290 = sphi 0, %s274
    $region4: #{simple_attention_forward.1} parent=1 // loop_header_branch
      %23 = sbr.rel (%p21) target = $region8
    $region5: #{simple_attention_forward.1} parent=1 // loop_body
      %s25 = ssub.s32 %s20, 1
      %s26 = ssub.s32 %s20, 2
      %s27 = sadd.s32 %s20, 1
      %s28 = ssub.s32 %s20, %s27
      %p29 = scmp.eq.s32.totalorder %s28, 0
      %s31 = sadd.s32 %s30, 1
      %s32 = scalar_select %p29, %s30, %s31
      %p35 = pneg %p29
      %p36 = scmp.eq.s32.totalorder %s20, 1
      %p37 = por %p35, %p36
      %p38 = scmp.ne.s32.totalorder %s30, %s33
      %p39 = scmp.eq.s32.totalorder %s20, 0
      %p40 = por %p38, %p39
      %p41 = scmp.ne.s32.totalorder %s30, %s33
      %p42 = scmp.eq.s32.totalorder %s25, 1
      %p43 = por %p41, %p42
      %p44 = scmp.ne.s32.totalorder %s33, %s34
      %p45 = scmp.eq.s32.totalorder %s25, 0
      %p46 = por %p44, %p45
      %p47 = scmp.ne.s32.totalorder %s33, %s34
      %p48 = scmp.eq.s32.totalorder %s26, 1
      %p49 = por %p47, %p48
      %p51 = scmp.ne.s32.totalorder %s34, %s50
      %p52 = scmp.eq.s32.totalorder %s26, 0
      %p53 = por %p51, %p52
      %s54 = ssub.s32 %s20, %s27
      %p55 = scmp.eq.s32.totalorder %s54, 0
      %s57 = sadd.s32 %s56, 1
      %s58 = scalar_select %p55, %s56, %s57
      %p61 = pneg %p55
      %p62 = scmp.eq.s32.totalorder %s20, 1
      %p63 = por %p61, %p62
      %p64 = scmp.ne.s32.totalorder %s56, %s59
      %p65 = scmp.eq.s32.totalorder %s20, 0
      %p66 = por %p64, %p65
      %p67 = scmp.ne.s32.totalorder %s56, %s59
      %p68 = scmp.eq.s32.totalorder %s25, 1
      %p69 = por %p67, %p68
      %p70 = scmp.ne.s32.totalorder %s59, %s60
      %p71 = scmp.eq.s32.totalorder %s25, 0
      %p72 = por %p70, %p71
      %p73 = scmp.ne.s32.totalorder %s59, %s60
      %p74 = scmp.eq.s32.totalorder %s26, 1
      %p75 = por %p73, %p74
      %p77 = scmp.ne.s32.totalorder %s60, %s76
      %p78 = scmp.eq.s32.totalorder %s26, 0
      %p79 = por %p77, %p78
      %s80 = ssub.s32 %s20, %s27
      %p81 = scmp.eq.s32.totalorder %s80, 0
      %s83 = sadd.s32 %s82, 1
      %s84 = scalar_select %p81, %s82, %s83
      %p87 = pneg %p81
      %p88 = scmp.eq.s32.totalorder %s20, 1
      %p89 = por %p87, %p88
      %p90 = scmp.ne.s32.totalorder %s82, %s85
      %p91 = scmp.eq.s32.totalorder %s20, 0
      %p92 = por %p90, %p91
      %p93 = scmp.ne.s32.totalorder %s82, %s85
      %p94 = scmp.eq.s32.totalorder %s25, 1
      %p95 = por %p93, %p94
      %p96 = scmp.ne.s32.totalorder %s85, %s86
      %p97 = scmp.eq.s32.totalorder %s25, 0
      %p98 = por %p96, %p97
      %p99 = scmp.ne.s32.totalorder %s85, %s86
      %p100 = scmp.eq.s32.totalorder %s26, 1
      %p101 = por %p99, %p100
      %p103 = scmp.ne.s32.totalorder %s86, %s102
      %p104 = scmp.eq.s32.totalorder %s26, 0
      %p105 = por %p103, %p104
      %s106 = ssub.s32 %s20, %s27
      %p107 = scmp.eq.s32.totalorder %s106, 0
      %s109 = sadd.s32 %s108, 1
      %s110 = scalar_select %p107, %s108, %s109
      %p113 = pneg %p107
      %p114 = scmp.eq.s32.totalorder %s20, 1
      %p115 = por %p113, %p114
      %p116 = scmp.ne.s32.totalorder %s108, %s111
      %p117 = scmp.eq.s32.totalorder %s20, 0
      %p118 = por %p116, %p117
      %p119 = scmp.ne.s32.totalorder %s108, %s111
      %p120 = scmp.eq.s32.totalorder %s25, 1
      %p121 = por %p119, %p120
      %p122 = scmp.ne.s32.totalorder %s111, %s112
      %p123 = scmp.eq.s32.totalorder %s25, 0
      %p124 = por %p122, %p123
      %p125 = scmp.ne.s32.totalorder %s111, %s112
      %p126 = scmp.eq.s32.totalorder %s26, 1
      %p127 = por %p125, %p126
      %p129 = scmp.ne.s32.totalorder %s112, %s128
      %p130 = scmp.eq.s32.totalorder %s26, 0
      %p131 = por %p129, %p130
      %s133 = sadd.s32 %s132, 1
      %p136 = scmp.eq.s32.totalorder %s20, 1
      %p137 = scmp.ne.s32.totalorder %s132, %s134
      %p138 = scmp.eq.s32.totalorder %s20, 0
      %p139 = por %p137, %p138
      %p140 = scmp.ne.s32.totalorder %s132, %s134
      %p141 = scmp.eq.s32.totalorder %s25, 1
      %p142 = por %p140, %p141
      %p143 = scmp.ne.s32.totalorder %s134, %s135
      %p144 = scmp.eq.s32.totalorder %s25, 0
      %p145 = por %p143, %p144
      %p146 = scmp.ne.s32.totalorder %s134, %s135
      %p147 = scmp.eq.s32.totalorder %s26, 1
      %p148 = por %p146, %p147
      %p150 = scmp.ne.s32.totalorder %s135, %s149
      %p151 = scmp.eq.s32.totalorder %s26, 0
      %p152 = por %p150, %p151
      %s154 = sadd.s32 %s153, 1
      %p157 = scmp.eq.s32.totalorder %s20, 1
      %p158 = scmp.ne.s32.totalorder %s153, %s155
      %p159 = scmp.eq.s32.totalorder %s20, 0
      %p160 = por %p158, %p159
      %p161 = scmp.ne.s32.totalorder %s153, %s155
      %p162 = scmp.eq.s32.totalorder %s25, 1
      %p163 = por %p161, %p162
      %p164 = scmp.ne.s32.totalorder %s155, %s156
      %p165 = scmp.eq.s32.totalorder %s25, 0
      %p166 = por %p164, %p165
      %p167 = scmp.ne.s32.totalorder %s155, %s156
      %p168 = scmp.eq.s32.totalorder %s26, 1
      %p169 = por %p167, %p168
      %p171 = scmp.ne.s32.totalorder %s156, %s170
      %p172 = scmp.eq.s32.totalorder %s26, 0
      %p173 = por %p171, %p172
      %s174 = ssub.s32 %s20, %s27
      %p175 = scmp.eq.s32.totalorder %s174, 0
      %s177 = sadd.s32 %s176, 1
      %s178 = scalar_select %p175, %s176, %s177
      %p181 = pneg %p175
      %p182 = scmp.eq.s32.totalorder %s20, 1
      %p183 = por %p181, %p182
      %p184 = scmp.ne.s32.totalorder %s176, %s179
      %p185 = scmp.eq.s32.totalorder %s20, 0
      %p186 = por %p184, %p185
      %p187 = scmp.ne.s32.totalorder %s176, %s179
      %p188 = scmp.eq.s32.totalorder %s25, 1
      %p189 = por %p187, %p188
      %p190 = scmp.ne.s32.totalorder %s179, %s180
      %p191 = scmp.eq.s32.totalorder %s25, 0
      %p192 = por %p190, %p191
      %p193 = scmp.ne.s32.totalorder %s179, %s180
      %p194 = scmp.eq.s32.totalorder %s26, 1
      %p195 = por %p193, %p194
      %p197 = scmp.ne.s32.totalorder %s180, %s196
      %p198 = scmp.eq.s32.totalorder %s26, 0
      %p199 = por %p197, %p198
      %s201 = sadd.s32 %s200, 1
      %p204 = scmp.eq.s32.totalorder %s20, 1
      %p205 = scmp.ne.s32.totalorder %s200, %s202
      %p206 = scmp.eq.s32.totalorder %s20, 0
      %p207 = por %p205, %p206
      %p208 = scmp.ne.s32.totalorder %s200, %s202
      %p209 = scmp.eq.s32.totalorder %s25, 1
      %p210 = por %p208, %p209
      %p211 = scmp.ne.s32.totalorder %s202, %s203
      %p212 = scmp.eq.s32.totalorder %s25, 0
      %p213 = por %p211, %p212
      %p214 = scmp.ne.s32.totalorder %s202, %s203
      %p215 = scmp.eq.s32.totalorder %s26, 1
      %p216 = por %p214, %p215
      %p218 = scmp.ne.s32.totalorder %s203, %s217
      %p219 = scmp.eq.s32.totalorder %s26, 0
      %p220 = por %p218, %p219
      %s222 = sadd.s32 %s221, 1
      %p225 = scmp.eq.s32.totalorder %s20, 1
      %p226 = scmp.ne.s32.totalorder %s221, %s223
      %p227 = scmp.eq.s32.totalorder %s20, 0
      %p228 = por %p226, %p227
      %p229 = scmp.ne.s32.totalorder %s221, %s223
      %p230 = scmp.eq.s32.totalorder %s25, 1
      %p231 = por %p229, %p230
      %p232 = scmp.ne.s32.totalorder %s223, %s224
      %p233 = scmp.eq.s32.totalorder %s25, 0
      %p234 = por %p232, %p233
      %p235 = scmp.ne.s32.totalorder %s223, %s224
      %p236 = scmp.eq.s32.totalorder %s26, 1
      %p237 = por %p235, %p236
      %p239 = scmp.ne.s32.totalorder %s224, %s238
      %p240 = scmp.eq.s32.totalorder %s26, 0
      %p241 = por %p239, %p240
      %s242 = ssub.s32 %s20, %s27
      %p243 = scmp.eq.s32.totalorder %s242, 0
      %s245 = sadd.s32 %s244, 1
      %s246 = scalar_select %p243, %s244, %s245
      %p249 = pneg %p243
      %p250 = scmp.eq.s32.totalorder %s20, 1
      %p251 = por %p249, %p250
      %p252 = scmp.ne.s32.totalorder %s244, %s247
      %p253 = scmp.eq.s32.totalorder %s20, 0
      %p254 = por %p252, %p253
      %p255 = scmp.ne.s32.totalorder %s244, %s247
      %p256 = scmp.eq.s32.totalorder %s25, 1
      %p257 = por %p255, %p256
      %p258 = scmp.ne.s32.totalorder %s247, %s248
      %p259 = scmp.eq.s32.totalorder %s25, 0
      %p260 = por %p258, %p259
      %p261 = scmp.ne.s32.totalorder %s247, %s248
      %p262 = scmp.eq.s32.totalorder %s26, 1
      %p263 = por %p261, %p262
      %p265 = scmp.ne.s32.totalorder %s248, %s264
      %p266 = scmp.eq.s32.totalorder %s26, 0
      %p267 = por %p265, %p266
      %s268 = ssub.s32 %s20, %s27
      %p269 = scmp.eq.s32.totalorder %s268, 0
      %s271 = sadd.s32 %s270, 1
      %s272 = scalar_select %p269, %s270, %s271
      %p275 = pneg %p269
      %p276 = scmp.eq.s32.totalorder %s20, 1
      %p277 = por %p275, %p276
      %p278 = scmp.ne.s32.totalorder %s270, %s273
      %p279 = scmp.eq.s32.totalorder %s20, 0
      %p280 = por %p278, %p279
      %p281 = scmp.ne.s32.totalorder %s270, %s273
      %p282 = scmp.eq.s32.totalorder %s25, 1
      %p283 = por %p281, %p282
      %p284 = scmp.ne.s32.totalorder %s273, %s274
      %p285 = scmp.eq.s32.totalorder %s25, 0
      %p286 = por %p284, %p285
      %p287 = scmp.ne.s32.totalorder %s273, %s274
      %p288 = scmp.eq.s32.totalorder %s26, 1
      %p289 = por %p287, %p288
      %p291 = scmp.ne.s32.totalorder %s274, %s290
      %p292 = scmp.eq.s32.totalorder %s26, 0
      %p293 = por %p291, %p292
      %p294 = scmp.le.s32.totalorder 1, %s20
      %p295 = scmp.lt.s32.totalorder %s20, 3
      %p296 = pnand %p294, %p295
      %p297 = pneg %p296
      // Predicated region
      $region9: #{simple_attention_forward.1} parent=5 // pred_check
        _
      $region10: #{simple_attention_forward.1} parent=5 // pred_check_branch
        %299 = sbr.rel (%p296) target = $region12
      $region11: #{simple_attention_forward.1} parent=5 // pred_region
        %s300 = ssub.s32 %s20, 1
        // Predicated region
        $region13: #{simple_attention_forward.1} parent=11 // pred_check
          %p301 = pneg %p145
        $region14: #{simple_attention_forward.1} parent=11 // pred_check_branch
          %303 = sbr.rel (%p301) target = $region16
        $region15: #{simple_attention_forward.1} parent=11 // pred_region
          _
        $region16: #{simple_attention_forward.1} parent=11 // pred_fallthru
          _
        // Predicated region
        $region17: #{simple_attention_forward.1} parent=11 // pred_check
          %p304 = pneg %p166
        $region18: #{simple_attention_forward.1} parent=11 // pred_check_branch
          %306 = sbr.rel (%p304) target = $region20
        $region19: #{simple_attention_forward.1} parent=11 // pred_region
          _
        $region20: #{simple_attention_forward.1} parent=11 // pred_fallthru
          _
        // Predicated region
        $region21: #{simple_attention_forward.1} parent=11 // pred_check
          %p307 = pneg %p213
        $region22: #{simple_attention_forward.1} parent=11 // pred_check_branch
          %309 = sbr.rel (%p307) target = $region24
        $region23: #{simple_attention_forward.1} parent=11 // pred_region
          _
        $region24: #{simple_attention_forward.1} parent=11 // pred_fallthru
          _
        // Predicated region
        $region25: #{simple_attention_forward.1} parent=11 // pred_check
          %p310 = pneg %p234
        $region26: #{simple_attention_forward.1} parent=11 // pred_check_branch
          %312 = sbr.rel (%p310) target = $region28
        $region27: #{simple_attention_forward.1} parent=11 // pred_region
          _
        $region28: #{simple_attention_forward.1} parent=11 // pred_fallthru
          _
      $region12: #{simple_attention_forward.1} parent=5 // pred_fallthru
        _
      %p313 = scmp.lt.s32.totalorder %s20, 2
      // Predicated region
      $region29: #{simple_attention_forward.1} parent=5 // pred_check
        %p314 = pneg %p313
      $region30: #{simple_attention_forward.1} parent=5 // pred_check_branch
        %316 = sbr.rel (%p314) target = $region32
      $region31: #{simple_attention_forward.1} parent=5 // pred_region
        // Predicated region
        $region33: #{simple_attention_forward.1} parent=31 // pred_check
          %p317 = pneg %p40
        $region34: #{simple_attention_forward.1} parent=31 // pred_check_branch
          %319 = sbr.rel (%p317) target = $region36
        $region35: #{simple_attention_forward.1} parent=31 // pred_region
          %s320 = smul.u32 2, %s20
          %p321 = scmp.lt.s32.totalorder %s320, 3
          %s322 = scalar_select %p321, %s320, 3
          %s323 = smul.addr %s322, 8
          %s324 = scalar_lea.vmem %s0, %s323
          %s325 = smul.u32 2, %s20
        $region36: #{simple_attention_forward.1} parent=31 // pred_fallthru
          _
        // Predicated region
        $region37: #{simple_attention_forward.1} parent=31 // pred_check
          %p326 = pneg %p66
        $region38: #{simple_attention_forward.1} parent=31 // pred_check_branch
          %328 = sbr.rel (%p326) target = $region40
        $region39: #{simple_attention_forward.1} parent=31 // pred_region
          %s329 = smul.u32 2, %s20
          %p330 = scmp.lt.s32.totalorder %s329, 3
          %s331 = scalar_select %p330, %s329, 3
          %s332 = smul.addr %s331, 8
          %s333 = scalar_lea.vmem %s1, %s332
          %s334 = smul.u32 2, %s20
        $region40: #{simple_attention_forward.1} parent=31 // pred_fallthru
          _
        // Predicated region
        $region41: #{simple_attention_forward.1} parent=31 // pred_check
          %p335 = pneg %p92
        $region42: #{simple_attention_forward.1} parent=31 // pred_check_branch
          %337 = sbr.rel (%p335) target = $region44
        $region43: #{simple_attention_forward.1} parent=31 // pred_region
          %s338 = smul.u32 2, %s20
          %p339 = scmp.lt.s32.totalorder %s338, 3
          %s340 = scalar_select %p339, %s338, 3
          %s341 = smul.addr %s340, 8
          %s342 = scalar_lea.vmem %s2, %s341
          %s343 = smul.u32 2, %s20
        $region44: #{simple_attention_forward.1} parent=31 // pred_fallthru
          _
        // Predicated region
        $region45: #{simple_attention_forward.1} parent=31 // pred_check
          %p344 = pneg %p118
        $region46: #{simple_attention_forward.1} parent=31 // pred_check_branch
          %346 = sbr.rel (%p344) target = $region48
        $region47: #{simple_attention_forward.1} parent=31 // pred_region
          %s347 = smul.u32 2, %s20
          %p348 = scmp.lt.s32.totalorder %s347, 3
          %s349 = scalar_select %p348, %s347, 3
          %s350 = smul.addr %s349, 8
          %s351 = scalar_lea.vmem %s3, %s350
          %s352 = smul.u32 2, %s20
        $region48: #{simple_attention_forward.1} parent=31 // pred_fallthru
          _
        // Predicated region
        $region49: #{simple_attention_forward.1} parent=31 // pred_check
          %p353 = pneg %p186
        $region50: #{simple_attention_forward.1} parent=31 // pred_check_branch
          %355 = sbr.rel (%p353) target = $region52
        $region51: #{simple_attention_forward.1} parent=31 // pred_region
          %p356 = scmp.lt.s32.totalorder %s20, 1
          %s357 = scalar_select %p356, %s20, 1
          %s358 = smul.addr %s357, 8
          %s359 = smul.addr %s358, 8
          %s360 = scalar_lea.vmem %s6, %s359
        $region52: #{simple_attention_forward.1} parent=31 // pred_fallthru
          _
      $region32: #{simple_attention_forward.1} parent=5 // pred_fallthru
        _
      %p361 = scmp.le.s32.totalorder 1, %s20
      %p362 = scmp.lt.s32.totalorder %s20, 3
      %p363 = pnand %p361, %p362
      %p364 = pneg %p363
      // Predicated region
      $region53: #{simple_attention_forward.1} parent=5 // pred_check
        _
      $region54: #{simple_attention_forward.1} parent=5 // pred_check_branch
        %366 = sbr.rel (%p363) target = $region56
      $region55: #{simple_attention_forward.1} parent=5 // pred_region
        %s367 = ssub.s32 %s20, 1
        %s368 = smul.u32 2, %s25
        %p369 = scmp.lt.s32.totalorder %s368, 3
        %s370 = scalar_select %p369, %s368, 3
        %s371 = smul.addr %s370, 8
        %s372 = scalar_lea.vmem %s0, %s371
        %p373 = pneg %p46
        %p374 = pneg %p43
        %s375 = smul.u32 2, %s25
        %p376 = scmp.lt.s32.totalorder %s375, 3
        %s377 = scalar_select %p376, %s375, 3
        %s378 = smul.addr %s377, 8
        %s379 = scalar_lea.vmem %s1, %s378
        %p380 = pneg %p72
        %p381 = pneg %p69
        %s382 = smul.u32 2, %s25
        %p383 = scmp.lt.s32.totalorder %s382, 3
        %s384 = scalar_select %p383, %s382, 3
        %s385 = smul.addr %s384, 8
        %s386 = scalar_lea.vmem %s2, %s385
        %p387 = pneg %p98
        %p388 = pneg %p95
        %s389 = smul.u32 2, %s25
        %p390 = scmp.lt.s32.totalorder %s389, 3
        %s391 = scalar_select %p390, %s389, 3
        %s392 = smul.addr %s391, 8
        %s393 = scalar_lea.vmem %s3, %s392
        %p394 = pneg %p124
        %p395 = pneg %p121
        %p396 = pneg %p145
        %p397 = pneg %p142
        %p398 = pneg %p166
        %p399 = pneg %p163
        %p400 = scmp.lt.s32.totalorder %s25, 1
        %s401 = scalar_select %p400, %s25, 1
        %s402 = smul.addr %s401, 8
        %s403 = smul.addr %s402, 8
        %s404 = scalar_lea.vmem %s6, %s403
        %p405 = pneg %p192
        %p406 = pneg %p189
        %p407 = pneg %p213
        %p408 = pneg %p210
        %p409 = pneg %p234
        %p410 = pneg %p231
        %p411 = pneg %p260
        %p412 = pneg %p257
        %s413 = sand.u32 %s247, 1
        %s414 = scalar_lea.sflag [#allocation3], %s413
        %s415 = sand.u32 %s247, 1
        %s416 = smul.addr %s415, 16
        %s417 = scalar_lea.vmem [#allocation2], %s416
        %p418 = pneg %p286
        %p419 = pneg %p283
        %s420 = smul.u32 2, %s25
        %p421 = scmp.lt.s32.totalorder %s420, 3
        %s422 = scalar_select %p421, %s420, 3
        %s423 = smul.addr %s422, 8
        %s424 = scalar_lea.vmem %s10, %s423
        %s425 = smul.u32 2, %s25
        %p426 = scmp.lt.s32.totalorder %s425, 3
        %s427 = scalar_select %p426, %s425, 3
        %s428 = smul.addr %s427, 8
        %s429 = scalar_lea.vmem %s0, %s428
        %s430 = smul.u32 2, %s25
        %s431 = smul.u32 2, %s25
        %p432 = scmp.lt.s32.totalorder %s431, 3
        %s433 = scalar_select %p432, %s431, 3
        %s434 = smul.addr %s433, 8
        %s435 = scalar_lea.vmem %s1, %s434
        %s436 = smul.u32 2, %s25
        %s437 = smul.u32 2, %s25
        %p438 = scmp.lt.s32.totalorder %s437, 3
        %s439 = scalar_select %p438, %s437, 3
        %s440 = smul.addr %s439, 8
        %s441 = scalar_lea.vmem %s2, %s440
        %s442 = smul.u32 2, %s25
        %s443 = smul.u32 2, %s25
        %p444 = scmp.lt.s32.totalorder %s443, 3
        %s445 = scalar_select %p444, %s443, 3
        %s446 = smul.addr %s445, 8
        %s447 = scalar_lea.vmem %s3, %s446
        %s448 = smul.u32 2, %s25
        %p449 = scmp.lt.s32.totalorder %s25, 1
        %s450 = scalar_select %p449, %s25, 1
        %s451 = smul.addr %s450, 8
        %s452 = smul.addr %s451, 8
        %s453 = scalar_lea.vmem %s6, %s452
        %s454 = smul.u32 2, %s25
        %s455 = smul.u32 2, %s25
        %p456 = scmp.lt.s32.totalorder %s455, 3
        %s457 = scalar_select %p456, %s455, 3
        %s458 = smul.addr %s457, 8
        %s459 = scalar_lea.vmem %s10, %s458
        %s460 = smul.u32 2, %s25
        %v461 = vld [vmem:[%s429] sm:$0xff]
        %v462 = vld [vmem:[%s429 + $0x8] sm:$0xff]
        %v463 = vld [vmem:[%s4] sm:$0xff]
        %v464 = vld [vmem:[%s4 + $0x8] sm:$0xff]
        %v465 = vld [vmem:[%s4 + $0x10] sm:$0xff]
        %v466 = vld [vmem:[%s4 + $0x18] sm:$0xff]
        %v467 = vld [vmem:[%s5] sm:$0x1]
        %v469 = vperm.slane %v467, 0
        %vm471 = vcmask 261120
        %v473 = vsel %vm471, %v461, 0
        %v476 = vsel %vm471, %v462, 0
        %478 = vmatpush.msra.mxu0 0.0
        %479 = vmatpush.msra.mxu0 0.0
        %480 = vmatpush.msra.mxu0 0.0
        %481 = vmatpush.msra.mxu0 0.0
        %482 = vmatpush.msra.mxu0 0.0
        %483 = vmatpush.msra.mxu0 0.0
        %484 = vmatpush.msra.mxu0 0.0
        %485 = vmatpush.msra.mxu0 0.0
        %486 = vmatpush.msra.mxu0 0.0
        %487 = vmatpush.msra.mxu0 0.0
        %488 = vmatpush.msra.mxu0 0.0
        %489 = vmatpush.msra.mxu0 0.0
        %490 = vmatpush.msra.mxu0 %v466
        %491 = vmatpush.msra.mxu0 %v465
        %492 = vmatpush.msra.mxu0 %v464
        %493 = vmatpush.msra.mxu0 %v463
        %494 = vmatmul.f32.gmra.mxu0 %v473
        %v495 = vpop.f32.mrf.mxu0
        %v496 = vadd.f32 %v469, %v495
        %497 = vmatmul.f32.gmra.mxu0 %v476
        %v498 = vpop.f32.mrf.mxu0
        %v499 = vadd.f32 %v469, %v498
        %500 = vdwg.mxu0
        %v501 = vld [vmem:[%s435] sm:$0xff]
        %v502 = vld [vmem:[%s435 + $0x8] sm:$0xff]
        %s503 = scalar_lea.vmem %s4, 32
        %v504 = vld [vmem:[%s503] sm:$0xff]
        %v505 = vld [vmem:[%s503 + $0x8] sm:$0xff]
        %v506 = vld [vmem:[%s503 + $0x10] sm:$0xff]
        %v507 = vld [vmem:[%s503 + $0x18] sm:$0xff]
        %s508 = scalar_lea.vmem %s5, 1
        %v509 = vld [vmem:[%s508] sm:$0x1]
        %v511 = vperm.slane %v509, 0
        %v514 = vsel %vm471, %v501, 0
        %v517 = vsel %vm471, %v502, 0
        %519 = vmatpush.msra.mxu0 0.0
        %520 = vmatpush.msra.mxu0 0.0
        %521 = vmatpush.msra.mxu0 0.0
        %522 = vmatpush.msra.mxu0 0.0
        %523 = vmatpush.msra.mxu0 0.0
        %524 = vmatpush.msra.mxu0 0.0
        %525 = vmatpush.msra.mxu0 0.0
        %526 = vmatpush.msra.mxu0 0.0
        %527 = vmatpush.msra.mxu0 0.0
        %528 = vmatpush.msra.mxu0 0.0
        %529 = vmatpush.msra.mxu0 0.0
        %530 = vmatpush.msra.mxu0 0.0
        %531 = vmatpush.msra.mxu0 %v507
        %532 = vmatpush.msra.mxu0 %v506
        %533 = vmatpush.msra.mxu0 %v505
        %534 = vmatpush.msra.mxu0 %v504
        %535 = vmatmul.f32.gmra.mxu0 %v514
        %v536 = vpop.f32.mrf.mxu0
        %v537 = vadd.f32 %v511, %v536
        %538 = vmatmul.f32.gmra.mxu0 %v517
        %v539 = vpop.f32.mrf.mxu0
        %v540 = vadd.f32 %v511, %v539
        %541 = vdwg.mxu0
        %v542 = vld [vmem:[%s441] sm:$0xff]
        %v543 = vld [vmem:[%s441 + $0x8] sm:$0xff]
        %s544 = scalar_lea.vmem %s4, 64
        %v545 = vld [vmem:[%s544] sm:$0xff]
        %v546 = vld [vmem:[%s544 + $0x8] sm:$0xff]
        %v547 = vld [vmem:[%s544 + $0x10] sm:$0xff]
        %v548 = vld [vmem:[%s544 + $0x18] sm:$0xff]
        %s549 = scalar_lea.vmem %s5, 2
        %v550 = vld [vmem:[%s549] sm:$0x1]
        %v552 = vperm.slane %v550, 0
        %v555 = vsel %vm471, %v542, 0
        %v558 = vsel %vm471, %v543, 0
        %560 = vmatpush.msra.mxu0 0.0
        %561 = vmatpush.msra.mxu0 0.0
        %562 = vmatpush.msra.mxu0 0.0
        %563 = vmatpush.msra.mxu0 0.0
        %564 = vmatpush.msra.mxu0 0.0
        %565 = vmatpush.msra.mxu0 0.0
        %566 = vmatpush.msra.mxu0 0.0
        %567 = vmatpush.msra.mxu0 0.0
        %568 = vmatpush.msra.mxu0 0.0
        %569 = vmatpush.msra.mxu0 0.0
        %570 = vmatpush.msra.mxu0 0.0
        %571 = vmatpush.msra.mxu0 0.0
        %572 = vmatpush.msra.mxu0 %v548
        %573 = vmatpush.msra.mxu0 %v547
        %574 = vmatpush.msra.mxu0 %v546
        %575 = vmatpush.msra.mxu0 %v545
        %576 = vmatmul.f32.gmra.mxu0 %v555
        %v577 = vpop.f32.mrf.mxu0
        %v578 = vadd.f32 %v552, %v577
        %579 = vmatmul.f32.gmra.mxu0 %v558
        %v580 = vpop.f32.mrf.mxu0
        %v581 = vadd.f32 %v552, %v580
        %582 = vdwg.mxu0
        %v583 = vmul.f32 %v496, 0.020833334
        %v584 = vmul.f32 %v499, 0.020833334
        %v585 = vld [vmem:[%s447] sm:$0xff]
        %v586 = vld [vmem:[%s447 + $0x8] sm:$0xff]
        %vm587 = vcmask 64512
        %v589 = vsel %vm587, %v585, 0
        %v592 = vsel %vm587, %v586, 0
        %594 = vmatpush.xpose.msra.mxu0 0.0
        %595 = vmatpush.xpose.msra.mxu0 0.0
        %596 = vmatpush.xpose.msra.mxu0 0.0
        %597 = vmatpush.xpose.msra.mxu0 0.0
        %598 = vmatpush.xpose.msra.mxu0 0.0
        %599 = vmatpush.xpose.msra.mxu0 0.0
        %600 = vmatpush.xpose.msra.mxu0 0.0
        %601 = vmatpush.xpose.msra.mxu0 0.0
        %602 = vmatpush.xpose.msra.mxu0 0.0
        %603 = vmatpush.xpose.msra.mxu0 0.0
        %604 = vmatpush.xpose.msra.mxu0 0.0
        %605 = vmatpush.xpose.msra.mxu0 0.0
        %606 = vmatpush.xpose.msra.mxu0 0.0
        %607 = vmatpush.xpose.msra.mxu0 0.0
        %608 = vmatpush.xpose.msra.mxu0 %v592
        %609 = vmatpush.xpose.msra.mxu0 %v589
        %610 = vmatmul.f32.gmra.mxu0 %v589
        %v611 = vpop.f32.mrf.mxu0
        %v612 = vadd.f32 0.0, %v611
        %613 = vmatmul.f32.gmra.mxu0 %v592
        %v614 = vpop.f32.mrf.mxu0
        %v615 = vadd.f32 0.0, %v614
        %616 = vdwg.mxu0
        %v618 = vsel %vm587, %v583, 0
        %v621 = vsel %vm587, %v584, 0
        %v624 = vsel %vm587, %v537, 0
        %v627 = vsel %vm587, %v540, 0
        %629 = vmatpush.xpose.msra.mxu0 0.0
        %630 = vmatpush.xpose.msra.mxu0 0.0
        %631 = vmatpush.xpose.msra.mxu0 0.0
        %632 = vmatpush.xpose.msra.mxu0 0.0
        %633 = vmatpush.xpose.msra.mxu0 0.0
        %634 = vmatpush.xpose.msra.mxu0 0.0
        %635 = vmatpush.xpose.msra.mxu0 0.0
        %636 = vmatpush.xpose.msra.mxu0 0.0
        %637 = vmatpush.xpose.msra.mxu0 0.0
        %638 = vmatpush.xpose.msra.mxu0 0.0
        %639 = vmatpush.xpose.msra.mxu0 0.0
        %640 = vmatpush.xpose.msra.mxu0 0.0
        %641 = vmatpush.xpose.msra.mxu0 0.0
        %642 = vmatpush.xpose.msra.mxu0 0.0
        %643 = vmatpush.xpose.msra.mxu0 %v627
        %644 = vmatpush.xpose.msra.mxu0 %v624
        %645 = vmatmul.f32.gmra.mxu0 %v618
        %v646 = vpop.f32.mrf.mxu0
        %v647 = vadd.f32 %v612, %v646
        %648 = vmatmul.f32.gmra.mxu0 %v621
        %v649 = vpop.f32.mrf.mxu0
        %v650 = vadd.f32 %v615, %v649
        %651 = vdwg.mxu0
        %vm652 = vcmask 130048
        %v654 = vsel %vm652, %v647, 0
        %v657 = vsel %vm652, %v650, 0
        %659 = vmatpush.msra.mxu0 0.0
        %660 = vmatpush.msra.mxu0 0.0
        %661 = vmatpush.msra.mxu0 0.0
        %662 = vmatpush.msra.mxu0 0.0
        %663 = vmatpush.msra.mxu0 0.0
        %664 = vmatpush.msra.mxu0 0.0
        %665 = vmatpush.msra.mxu0 0.0
        %666 = vmatpush.msra.mxu0 0.0
        %667 = vmatpush.msra.mxu0 0.0
        %668 = vmatpush.msra.mxu0 0.0
        %669 = vmatpush.msra.mxu0 0.0
        %670 = vmatpush.msra.mxu0 0.0
        %671 = vmatpush.msra.mxu0 0.0
        %672 = vmatpush.msra.mxu0 0.0
        %673 = vmatpush.msra.mxu0 %v581
        %674 = vmatpush.msra.mxu0 %v578
        %675 = vmatmul.f32.gmra.mxu0 %v654
        %v676 = vpop.f32.mrf.mxu0
        %v677 = vadd.f32 0.0, %v676
        %678 = vmatmul.f32.gmra.mxu0 %v657
        %v679 = vpop.f32.mrf.mxu0
        %v680 = vadd.f32 0.0, %v679
        %681 = vdwg.mxu0
        %682 = vrot.lane.b32.xlu0 %v583, 120
        %v683 = vpop.permute.xlu0 %682
        %684 = vrot.lane.b32.xlu0 %v584, 120
        %v685 = vpop.permute.xlu0 %684
        %686 = vrot.lane.b32.xlu0 %v537, 120
        %v687 = vpop.permute.xlu0 %686
        %688 = vrot.lane.b32.xlu0 %v540, 120
        %v689 = vpop.permute.xlu0 %688
        %v690 = vsel %vm587, %v683, 0
        %v692 = vsel %vm587, %v685, 0
        %v694 = vsel %vm587, %v687, 0
        %v696 = vsel %vm587, %v689, 0
        %698 = vmatpush.xpose.msra.mxu0 0.0
        %699 = vmatpush.xpose.msra.mxu0 0.0
        %700 = vmatpush.xpose.msra.mxu0 0.0
        %701 = vmatpush.xpose.msra.mxu0 0.0
        %702 = vmatpush.xpose.msra.mxu0 0.0
        %703 = vmatpush.xpose.msra.mxu0 0.0
        %704 = vmatpush.xpose.msra.mxu0 0.0
        %705 = vmatpush.xpose.msra.mxu0 0.0
        %706 = vmatpush.xpose.msra.mxu0 0.0
        %707 = vmatpush.xpose.msra.mxu0 0.0
        %708 = vmatpush.xpose.msra.mxu0 0.0
        %709 = vmatpush.xpose.msra.mxu0 0.0
        %710 = vmatpush.xpose.msra.mxu0 0.0
        %711 = vmatpush.xpose.msra.mxu0 0.0
        %712 = vmatpush.xpose.msra.mxu0 %v696
        %713 = vmatpush.xpose.msra.mxu0 %v694
        %714 = vmatmul.f32.gmra.mxu0 %v690
        %v715 = vpop.f32.mrf.mxu0
        %v716 = vadd.f32 %v612, %v715
        %717 = vmatmul.f32.gmra.mxu0 %v692
        %v718 = vpop.f32.mrf.mxu0
        %v719 = vadd.f32 %v615, %v718
        %720 = vdwg.mxu0
        %723 = vrot.lane.b32.xlu0 %v578, 120
        %v724 = vpop.permute.xlu0 %723
        %725 = vrot.lane.b32.xlu0 %v581, 120
        %v726 = vpop.permute.xlu0 %725
        %v730 = vsel %vm652, %v716, 0
        %v733 = vsel %vm652, %v719, 0
        %735 = vmatpush.msra.mxu0 0.0
        %736 = vmatpush.msra.mxu0 0.0
        %737 = vmatpush.msra.mxu0 0.0
        %738 = vmatpush.msra.mxu0 0.0
        %739 = vmatpush.msra.mxu0 0.0
        %740 = vmatpush.msra.mxu0 0.0
        %741 = vmatpush.msra.mxu0 0.0
        %742 = vmatpush.msra.mxu0 0.0
        %743 = vmatpush.msra.mxu0 0.0
        %744 = vmatpush.msra.mxu0 0.0
        %745 = vmatpush.msra.mxu0 0.0
        %746 = vmatpush.msra.mxu0 0.0
        %747 = vmatpush.msra.mxu0 0.0
        %748 = vmatpush.msra.mxu0 0.0
        %749 = vmatpush.msra.mxu0 %v726
        %750 = vmatpush.msra.mxu0 %v724
        %751 = vmatmul.f32.gmra.mxu0 %v730
        %v752 = vpop.f32.mrf.mxu0
        %v753 = vadd.f32 0.0, %v752
        %754 = vmatmul.f32.gmra.mxu0 %v733
        %v755 = vpop.f32.mrf.mxu0
        %v756 = vadd.f32 0.0, %v755
        %757 = vdwg.mxu0
        %758 = vrot.lane.b32.xlu0 %v583, 112
        %v759 = vpop.permute.xlu0 %758
        %760 = vrot.lane.b32.xlu0 %v584, 112
        %v761 = vpop.permute.xlu0 %760
        %762 = vrot.lane.b32.xlu0 %v537, 112
        %v763 = vpop.permute.xlu0 %762
        %764 = vrot.lane.b32.xlu0 %v540, 112
        %v765 = vpop.permute.xlu0 %764
        %v766 = vsel %vm587, %v759, 0
        %v768 = vsel %vm587, %v761, 0
        %v770 = vsel %vm587, %v763, 0
        %v772 = vsel %vm587, %v765, 0
        %774 = vmatpush.xpose.msra.mxu0 0.0
        %775 = vmatpush.xpose.msra.mxu0 0.0
        %776 = vmatpush.xpose.msra.mxu0 0.0
        %777 = vmatpush.xpose.msra.mxu0 0.0
        %778 = vmatpush.xpose.msra.mxu0 0.0
        %779 = vmatpush.xpose.msra.mxu0 0.0
        %780 = vmatpush.xpose.msra.mxu0 0.0
        %781 = vmatpush.xpose.msra.mxu0 0.0
        %782 = vmatpush.xpose.msra.mxu0 0.0
        %783 = vmatpush.xpose.msra.mxu0 0.0
        %784 = vmatpush.xpose.msra.mxu0 0.0
        %785 = vmatpush.xpose.msra.mxu0 0.0
        %786 = vmatpush.xpose.msra.mxu0 0.0
        %787 = vmatpush.xpose.msra.mxu0 0.0
        %788 = vmatpush.xpose.msra.mxu0 %v772
        %789 = vmatpush.xpose.msra.mxu0 %v770
        %790 = vmatmul.f32.gmra.mxu0 %v766
        %v791 = vpop.f32.mrf.mxu0
        %v792 = vadd.f32 %v612, %v791
        %793 = vmatmul.f32.gmra.mxu0 %v768
        %v794 = vpop.f32.mrf.mxu0
        %v795 = vadd.f32 %v615, %v794
        %796 = vdwg.mxu0
        %797 = vrot.lane.b32.xlu0 %v578, 112
        %v798 = vpop.permute.xlu0 %797
        %799 = vrot.lane.b32.xlu0 %v581, 112
        %v800 = vpop.permute.xlu0 %799
        %v804 = vsel %vm652, %v792, 0
        %v807 = vsel %vm652, %v795, 0
        %809 = vmatpush.msra.mxu0 0.0
        %810 = vmatpush.msra.mxu0 0.0
        %811 = vmatpush.msra.mxu0 0.0
        %812 = vmatpush.msra.mxu0 0.0
        %813 = vmatpush.msra.mxu0 0.0
        %814 = vmatpush.msra.mxu0 0.0
        %815 = vmatpush.msra.mxu0 0.0
        %816 = vmatpush.msra.mxu0 0.0
        %817 = vmatpush.msra.mxu0 0.0
        %818 = vmatpush.msra.mxu0 0.0
        %819 = vmatpush.msra.mxu0 0.0
        %820 = vmatpush.msra.mxu0 0.0
        %821 = vmatpush.msra.mxu0 0.0
        %822 = vmatpush.msra.mxu0 0.0
        %823 = vmatpush.msra.mxu0 %v800
        %824 = vmatpush.msra.mxu0 %v798
        %825 = vmatmul.f32.gmra.mxu0 %v804
        %v826 = vpop.f32.mrf.mxu0
        %v827 = vadd.f32 0.0, %v826
        %828 = vmatmul.f32.gmra.mxu0 %v807
        %v829 = vpop.f32.mrf.mxu0
        %v830 = vadd.f32 0.0, %v829
        %831 = vdwg.mxu0
        %832 = vrot.lane.b32.xlu0 %v583, 104
        %v833 = vpop.permute.xlu0 %832
        %834 = vrot.lane.b32.xlu0 %v584, 104
        %v835 = vpop.permute.xlu0 %834
        %836 = vrot.lane.b32.xlu0 %v537, 104
        %v837 = vpop.permute.xlu0 %836
        %838 = vrot.lane.b32.xlu0 %v540, 104
        %v839 = vpop.permute.xlu0 %838
        %v840 = vsel %vm587, %v833, 0
        %v842 = vsel %vm587, %v835, 0
        %v844 = vsel %vm587, %v837, 0
        %v846 = vsel %vm587, %v839, 0
        %848 = vmatpush.xpose.msra.mxu0 0.0
        %849 = vmatpush.xpose.msra.mxu0 0.0
        %850 = vmatpush.xpose.msra.mxu0 0.0
        %851 = vmatpush.xpose.msra.mxu0 0.0
        %852 = vmatpush.xpose.msra.mxu0 0.0
        %853 = vmatpush.xpose.msra.mxu0 0.0
        %854 = vmatpush.xpose.msra.mxu0 0.0
        %855 = vmatpush.xpose.msra.mxu0 0.0
        %856 = vmatpush.xpose.msra.mxu0 0.0
        %857 = vmatpush.xpose.msra.mxu0 0.0
        %858 = vmatpush.xpose.msra.mxu0 0.0
        %859 = vmatpush.xpose.msra.mxu0 0.0
        %860 = vmatpush.xpose.msra.mxu0 0.0
        %861 = vmatpush.xpose.msra.mxu0 0.0
        %862 = vmatpush.xpose.msra.mxu0 %v846
        %863 = vmatpush.xpose.msra.mxu0 %v844
        %864 = vmatmul.f32.gmra.mxu0 %v840
        %v865 = vpop.f32.mrf.mxu0
        %v866 = vadd.f32 %v612, %v865
        %867 = vmatmul.f32.gmra.mxu0 %v842
        %v868 = vpop.f32.mrf.mxu0
        %v869 = vadd.f32 %v615, %v868
        %870 = vdwg.mxu0
        %871 = vrot.lane.b32.xlu0 %v578, 104
        %v872 = vpop.permute.xlu0 %871
        %873 = vrot.lane.b32.xlu0 %v581, 104
        %v874 = vpop.permute.xlu0 %873
        %v878 = vsel %vm652, %v866, 0
        %v881 = vsel %vm652, %v869, 0
        %883 = vmatpush.msra.mxu0 0.0
        %884 = vmatpush.msra.mxu0 0.0
        %885 = vmatpush.msra.mxu0 0.0
        %886 = vmatpush.msra.mxu0 0.0
        %887 = vmatpush.msra.mxu0 0.0
        %888 = vmatpush.msra.mxu0 0.0
        %889 = vmatpush.msra.mxu0 0.0
        %890 = vmatpush.msra.mxu0 0.0
        %891 = vmatpush.msra.mxu0 0.0
        %892 = vmatpush.msra.mxu0 0.0
        %893 = vmatpush.msra.mxu0 0.0
        %894 = vmatpush.msra.mxu0 0.0
        %895 = vmatpush.msra.mxu0 0.0
        %896 = vmatpush.msra.mxu0 0.0
        %897 = vmatpush.msra.mxu0 %v874
        %898 = vmatpush.msra.mxu0 %v872
        %899 = vmatmul.f32.gmra.mxu0 %v878
        %v900 = vpop.f32.mrf.mxu0
        %v901 = vadd.f32 0.0, %v900
        %902 = vmatmul.f32.gmra.mxu0 %v881
        %v903 = vpop.f32.mrf.mxu0
        %v904 = vadd.f32 0.0, %v903
        %905 = vdwg.mxu0
        %906 = vrot.lane.b32.xlu0 %v716, 16
        %v907 = vpop.permute.xlu0 %906
        %908 = vrot.lane.b32.xlu0 %v719, 16
        %v909 = vpop.permute.xlu0 %908
        %912 = vrot.lane.b32.xlu0 %v792, 32
        %v913 = vpop.permute.xlu0 %912
        %914 = vrot.lane.b32.xlu0 %v795, 32
        %v915 = vpop.permute.xlu0 %914
        %918 = vrot.lane.b32.xlu0 %v866, 48
        %v919 = vpop.permute.xlu0 %918
        %920 = vrot.lane.b32.xlu0 %v869, 48
        %v921 = vpop.permute.xlu0 %920
        %v924 = vsel %vm652, %v647, %v907
        %v925 = vsel %vm652, %v650, %v909
        %v926 = vsel %vm471, %v924, %v913
        %v927 = vsel %vm471, %v925, %v915
        %vm928 = vcmask 392192
        %v929 = vsel %vm928, %v926, %v919
        %v930 = vsel %vm928, %v927, %v921
        %933 = vrot.lane.b32.xlu0 %v753, 8
        %v934 = vpop.permute.xlu0 %933
        %935 = vrot.lane.b32.xlu0 %v756, 8
        %v936 = vpop.permute.xlu0 %935
        %941 = vrot.lane.b32.xlu0 %v827, 16
        %v942 = vpop.permute.xlu0 %941
        %943 = vrot.lane.b32.xlu0 %v830, 16
        %v944 = vpop.permute.xlu0 %943
        %949 = vrot.lane.b32.xlu0 %v901, 24
        %v950 = vpop.permute.xlu0 %949
        %951 = vrot.lane.b32.xlu0 %v904, 24
        %v952 = vpop.permute.xlu0 %951
        %v955 = vsel %vm587, %v677, %v934
        %v956 = vsel %vm587, %v680, %v936
        %v957 = vsel %vm652, %v955, %v942
        %v958 = vsel %vm652, %v956, %v944
        %vm959 = vcmask 195584
        %v960 = vsel %vm959, %v957, %v950
        %v961 = vsel %vm959, %v958, %v952
        %vm962 = vcmask 523264
        %963 = vst.msk [vmem:[%s459] sm:$0xff] %vm962, %v929
        %964 = vst.msk [vmem:[%s459 + $0x8] sm:$0xff] %vm962, %v930
        %v965 = vld [vmem:[%s453] sm:$0xff]
        %v966 = vld [vmem:[%s453 + $0x8] sm:$0xff]
        %v967 = vld [vmem:[%s453 + $0x10] sm:$0xff]
        %v968 = vld [vmem:[%s453 + $0x18] sm:$0xff]
        %v969 = vld [vmem:[%s453 + $0x20] sm:$0xff]
        %v970 = vld [vmem:[%s453 + $0x28] sm:$0xff]
        %v971 = vld [vmem:[%s453 + $0x30] sm:$0xff]
        %v972 = vld [vmem:[%s453 + $0x38] sm:$0xff]
        %v973 = vld [vmem:[%s7] sm:$0xff]
        %v974 = vld [vmem:[%s7 + $0x8] sm:$0xff]
        %v975 = vld [vmem:[%s7 + $0x10] sm:$0xff]
        %v976 = vld [vmem:[%s7 + $0x18] sm:$0xff]
        %v978 = vsel %vm471, %v960, 0
        %v981 = vsel %vm471, %v961, 0
        %983 = vmatpush.msra.mxu0 0.0
        %984 = vmatpush.msra.mxu0 0.0
        %985 = vmatpush.msra.mxu0 0.0
        %986 = vmatpush.msra.mxu0 0.0
        %987 = vmatpush.msra.mxu0 0.0
        %988 = vmatpush.msra.mxu0 0.0
        %989 = vmatpush.msra.mxu0 0.0
        %990 = vmatpush.msra.mxu0 0.0
        %991 = vmatpush.msra.mxu0 0.0
        %992 = vmatpush.msra.mxu0 0.0
        %993 = vmatpush.msra.mxu0 0.0
        %994 = vmatpush.msra.mxu0 0.0
        %995 = vmatpush.msra.mxu0 %v976
        %996 = vmatpush.msra.mxu0 %v975
        %997 = vmatpush.msra.mxu0 %v974
        %998 = vmatpush.msra.mxu0 %v973
        %999 = vmatmul.f32.gmra.mxu0 %v978
        %v1000 = vpop.f32.mrf.mxu0
        %v1001 = vadd.f32 0.0, %v1000
        %1002 = vmatmul.f32.gmra.mxu0 %v981
        %v1003 = vpop.f32.mrf.mxu0
        %v1004 = vadd.f32 0.0, %v1003
        %1005 = vdwg.mxu0
        %v1007 = vsel %vm962, %v929, 0
        %v1010 = vsel %vm962, %v930, 0
        %1012 = vmatpush.msra.mxu0 0.0
        %1013 = vmatpush.msra.mxu0 0.0
        %1014 = vmatpush.msra.mxu0 0.0
        %1015 = vmatpush.msra.mxu0 0.0
        %1016 = vmatpush.msra.mxu0 0.0
        %1017 = vmatpush.msra.mxu0 0.0
        %1018 = vmatpush.msra.mxu0 0.0
        %1019 = vmatpush.msra.mxu0 0.0
        %1020 = vmatpush.msra.mxu0 %v972
        %1021 = vmatpush.msra.mxu0 %v971
        %1022 = vmatpush.msra.mxu0 %v970
        %1023 = vmatpush.msra.mxu0 %v969
        %1024 = vmatpush.msra.mxu0 %v968
        %1025 = vmatpush.msra.mxu0 %v967
        %1026 = vmatpush.msra.mxu0 %v966
        %1027 = vmatpush.msra.mxu0 %v965
        %1028 = vmatmul.f32.gmra.mxu0 %v1007
        %v1029 = vpop.f32.mrf.mxu0
        %v1030 = vadd.f32 %v1001, %v1029
        %1031 = vmatmul.f32.gmra.mxu0 %v1010
        %v1032 = vpop.f32.mrf.mxu0
        %v1033 = vadd.f32 %v1004, %v1032
        %1034 = vdwg.mxu0
        %v1035 = vld [vmem:[%s8] sm:$0x1]
        %v1037 = vperm.slane %v1035, 0
        %v1039 = vadd.f32 %v1030, %v1037
        %v1040 = vadd.f32 %v1033, %v1037
        %1041 = vst.msk [vmem:[%s417] sm:$0xff] %vm471, %v1039
        %1042 = vst.msk [vmem:[%s417 + $0x8] sm:$0xff] %vm471, %v1040
        %s1043 = sand.u32 %s247, 1
        %s1044 = scalar_lea.sflag [#allocation3], %s1043
        %s1045 = sand.u32 %s247, 1
        %s1046 = smul.addr %s1045, 16
        %s1047 = scalar_lea.vmem [#allocation2], %s1046
        %s1048 = smul.u32 2, %s25
        %p1049 = scmp.lt.s32.totalorder %s1048, 3
        %s1050 = scalar_select %p1049, %s1048, 3
        %s1051 = smul.addr %s1050, 8
        %s1052 = scalar_lea.vmem %s10, %s1051
        // Predicated region
        $region57: #{simple_attention_forward.1} parent=55 // pred_check
          %p1053 = pneg %p257
        $region58: #{simple_attention_forward.1} parent=55 // pred_check_branch
          %1055 = sbr.rel (%p1053) target = $region60
        $region59: #{simple_attention_forward.1} parent=55 // pred_region
          %s1056 = smul.u32 2, %s25
          %1058 = vsyncadd %s1044, 0
          %s1059 = smul.addr %s1056, 8
          %s1060 = scalar_lea.hbm %s9, %s1059
          %s1061 = sshll.u32 %s1047, 4
          %s1062 = int_to_ptr.vmem [resolvable:$true] %s1061
          %s1063 = sshll.u32 %s1060, 4
          %s1064 = int_to_ptr.hbm [resolvable:$true] %s1063
          %1069 = dma.vmem_to_hbm [thread:$0]  %s1062, 256, %s1064, %s1044, 128, 128, 8
        $region60: #{simple_attention_forward.1} parent=55 // pred_fallthru
          _
        // Predicated region
        $region61: #{simple_attention_forward.1} parent=55 // pred_check
          %p1070 = pneg %p283
        $region62: #{simple_attention_forward.1} parent=55 // pred_check_branch
          %1072 = sbr.rel (%p1070) target = $region64
        $region63: #{simple_attention_forward.1} parent=55 // pred_region
          %s1073 = smul.u32 2, %s25
        $region64: #{simple_attention_forward.1} parent=55 // pred_fallthru
          _
      $region56: #{simple_attention_forward.1} parent=5 // pred_fallthru
        _
      %p1074 = scmp.le.s32.totalorder 2, %s20
      // Predicated region
      $region65: #{simple_attention_forward.1} parent=5 // pred_check
        %p1075 = pneg %p1074
      $region66: #{simple_attention_forward.1} parent=5 // pred_check_branch
        %1077 = sbr.rel (%p1075) target = $region68
      $region67: #{simple_attention_forward.1} parent=5 // pred_region
        %s1078 = ssub.s32 %s20, 2
        // Predicated region
        $region69: #{simple_attention_forward.1} parent=67 // pred_check
          %p1079 = pneg %p263
        $region70: #{simple_attention_forward.1} parent=67 // pred_check_branch
          %1081 = sbr.rel (%p1079) target = $region72
        $region71: #{simple_attention_forward.1} parent=67 // pred_region
          %s1082 = sand.u32 %s248, 1
          %s1083 = scalar_lea.sflag [#allocation3], %s1082
          %s1084 = sand.u32 %s248, 1
          %s1085 = smul.addr %s1084, 16
          %s1086 = scalar_lea.vmem [#allocation2], %s1085
          %1088 = dma.done %s1083, 256
        $region72: #{simple_attention_forward.1} parent=67 // pred_fallthru
          _
        // Predicated region
        $region73: #{simple_attention_forward.1} parent=67 // pred_check
          %p1089 = pneg %p289
        $region74: #{simple_attention_forward.1} parent=67 // pred_check_branch
          %1091 = sbr.rel (%p1089) target = $region76
        $region75: #{simple_attention_forward.1} parent=67 // pred_region
          %s1092 = smul.u32 2, %s26
          %p1093 = scmp.lt.s32.totalorder %s1092, 3
          %s1094 = scalar_select %p1093, %s1092, 3
          %s1095 = smul.addr %s1094, 8
          %s1096 = scalar_lea.vmem %s10, %s1095
        $region76: #{simple_attention_forward.1} parent=67 // pred_fallthru
          _
      $region68: #{simple_attention_forward.1} parent=5 // pred_fallthru
        _
    $region6: #{simple_attention_forward.1} parent=1 // loop_footer
      %s24 = sadd.s32 1, %s20
    $region7: #{simple_attention_forward.1} parent=1 // loop_footer_branch
      %19 = sbr.rel target = $region3
    $region8: #{simple_attention_forward.1} parent=1 // loop_exit
      _
    %1097 = vsyncpa [#allocation3], 1
    %s1098 = scalar_lea.sflag [#allocation3], 1
    %1099 = vsyncpa %s1098, 1

</llo_original>
